<compile_context>
chip_gen: v7x
topology: tpu7x:2x2x1
jax: 0.10.0
libtpu: 0.0.40
codegen_flags: <defaults>
</compile_context>

<pallas_src>
import jax
import jax.numpy as jnp
import numpy as np
from jax.experimental import pallas as pl
from jax.experimental.pallas import tpu as pltpu


def _updater_kernel(delta_ref, mem_input_ref, mem_ref, h_ref,
                    tw_ref, tb_ref,
                    w_ih_msg_ref, w_ih_time_ref,
                    w_hh_ref, b_rnn_ref,
                    w_proj_ref, b_proj_ref,
                    upd_mem_ref, new_h_ref):
    # ---- TimeEncode: cos(delta_t * w + b) --------------------------------
    time_feat = jnp.cos(delta_ref[...] * tw_ref[...] + tb_ref[...])  # (tn, dim_time)

    # ---- RNNCell: tanh(x W_ih^T + h W_hh^T + (b_ih + b_hh)) --------------
    pre = (
        jnp.dot(mem_input_ref[...], w_ih_msg_ref[...],
                preferred_element_type=jnp.float32)
        + jnp.dot(time_feat, w_ih_time_ref[...],
                  preferred_element_type=jnp.float32)
        + jnp.dot(mem_ref[...], w_hh_ref[...],
                  preferred_element_type=jnp.float32)
        + b_rnn_ref[...]                                  # folded b_ih + b_hh
    )
    upd = jnp.tanh(pre)                                   # (tn, dim_mem)
    upd_mem_ref[...] = upd

    # ---- node_feat_proj + residual: h = upd + Linear(node_feat) ----------
    new_h_ref[...] = (
        upd
        + jnp.dot(h_ref[...], w_proj_ref[...],
                  preferred_element_type=jnp.float32)
        + b_proj_ref[...]
    )


def _round_up(x, m):
    return (x + m - 1) // m * m


def _choose_tile(n, max_tn=1024):
    """Pick (row_tile, padded_n).  Tile is a multiple of 8, capped at max_tn,
    and chosen so the grid has >= 2 steps whenever n > 8 (v7x megacore)."""
    if n <= 8:
        return 8, 8
    if n <= 2 * max_tn:
        tn = max(8, _round_up(pl.cdiv(n, 2), 8))
        return tn, 2 * tn
    return max_tn, _round_up(n, max_tn)


def rnn_memory_updater_forward(ts, mem_ts, mem_input, mem, node_feat, nid,
                               params, num_dst_nodes, *, max_tn=1024):
    """Runs the Pallas kernel and returns the same dict as the PyTorch module
    (plus the updated node embedding `h` and the full updated memory)."""
    N = ts.shape[0]
    dim_msg = mem_input.shape[1]
    dim_mem = mem.shape[1]
    dim_node = node_feat.shape[1]
    dim_time = params["time_w"].shape[0]

    tn, n_pad = _choose_tile(N, max_tn)
    pad = n_pad - N

    # ---- plain-JAX glue (O(N) / tiny) -------------------------------------
    delta = (ts - mem_ts).astype(jnp.float32).reshape(N, 1)
    mem_input_f = mem_input.astype(jnp.float32)
    mem_f = mem.astype(jnp.float32)
    node_feat_f = node_feat.astype(jnp.float32)
    if pad:
        delta = jnp.pad(delta, ((0, pad), (0, 0)))
        mem_input_f = jnp.pad(mem_input_f, ((0, pad), (0, 0)))
        mem_f = jnp.pad(mem_f, ((0, pad), (0, 0)))
        node_feat_f = jnp.pad(node_feat_f, ((0, pad), (0, 0)))

    tw = params["time_w"].reshape(1, dim_time).astype(jnp.float32)
    tb = params["time_b"].reshape(1, dim_time).astype(jnp.float32)
    w_ih_msg = params["w_ih"][:, :dim_msg].T             # (dim_msg, dim_mem)
    w_ih_time = params["w_ih"][:, dim_msg:].T            # (dim_time, dim_mem)
    b_rnn = (params["b_ih"] + params["b_hh"]).reshape(1, dim_mem)  # folded bias
    w_hh = params["w_hh"].T                              # (dim_mem, dim_mem)
    w_proj = params["w_proj"].T                          # (dim_node, dim_mem)
    b_proj = params["b_proj"].reshape(1, dim_mem)

    row = lambda i: (i, 0)       # tiled over padded N
    rep = lambda i: (0, 0)       # broadcast (weights, fetched once)

    grid_spec = pltpu.PrefetchScalarGridSpec(
        num_scalar_prefetch=0,
        grid=(n_pad // tn,),
        in_specs=[
            pl.BlockSpec((tn, 1), row),                 # delta_t
            pl.BlockSpec((tn, dim_msg), row),           # mem_input
            pl.BlockSpec((tn, dim_mem), row),           # mem
            pl.BlockSpec((tn, dim_node), row),          # node_feat (h)
            pl.BlockSpec((1, dim_time), rep),           # time_w
            pl.BlockSpec((1, dim_time), rep),           # time_b
            pl.BlockSpec((dim_msg, dim_mem), rep),      # W_ih (message part)^T
            pl.BlockSpec((dim_time, dim_mem), rep),     # W_ih (time part)^T
            pl.BlockSpec((dim_mem, dim_mem), rep),      # W_hh^T
            pl.BlockSpec((1, dim_mem), rep),            # b_ih + b_hh
            pl.BlockSpec((dim_node, dim_mem), rep),     # W_proj^T
            pl.BlockSpec((1, dim_mem), rep),            # b_proj
        ],
        out_specs=[
            pl.BlockSpec((tn, dim_mem), row),           # updated memory
            pl.BlockSpec((tn, dim_mem), row),           # new node embedding h
        ],
    )

    # Advisory cost estimate so XLA schedules the surrounding glue around us.
    flops = 2 * n_pad * (dim_msg + dim_time + dim_mem + dim_node) * dim_mem
    transcendentals = n_pad * (dim_time + dim_mem)
    bytes_accessed = 4 * (
        n_pad * (1 + dim_msg + dim_mem + dim_node + 2 * dim_mem)
        + (dim_msg + dim_time + dim_mem + dim_node) * dim_mem
        + 2 * dim_time + 2 * dim_mem)

    updated_memory, new_h = pl.pallas_call(
        _updater_kernel,
        out_shape=(
            jax.ShapeDtypeStruct((n_pad, dim_mem), jnp.float32),
            jax.ShapeDtypeStruct((n_pad, dim_mem), jnp.float32),
        ),
        grid_spec=grid_spec,
        compiler_params=pltpu.CompilerParams(
            dimension_semantics=("parallel",)),
        cost_estimate=pl.CostEstimate(
            flops=int(flops),
            transcendentals=int(transcendentals),
            bytes_accessed=int(bytes_accessed)),
    )(delta, mem_input_f, mem_f, node_feat_f,
      tw, tb, w_ih_msg, w_ih_time, w_hh, b_rnn, w_proj, b_proj)

    updated_memory = updated_memory[:N]
    new_h = new_h[:N]

    # TODO(synk): DGLBlock bookkeeping (srcdata dict mutation / num_dst_nodes)
    # has no Pallas equivalent; handled here in the wrapper.
    return {
        "last_updated_nid": nid[:num_dst_nodes],
        "last_updated_memory": updated_memory[:num_dst_nodes],
        "last_updated_ts": ts[:num_dst_nodes],
        "h": new_h,
        "updated_memory": updated_memory,
    }


def _reference(ts, mem_ts, mem_input, mem, node_feat, params):
    delta = ts - mem_ts
    time_feat = jnp.cos(delta[:, None] * params["time_w"][None, :]
                        + params["time_b"][None, :])
    x = jnp.concatenate([mem_input, time_feat], axis=1)
    upd = jnp.tanh(x @ params["w_ih"].T + params["b_ih"]
                   + mem @ params["w_hh"].T + params["b_hh"])
    new_h = upd + node_feat @ params["w_proj"].T + params["b_proj"]
    return upd, new_h


def _make_inputs(key, N, dim_message, dim_memory, dim_node):
    ks = jax.random.split(key, 5)
    ts = jax.random.uniform(ks[0], (N,), jnp.float32, 0.0, 100.0)
    mem_ts = ts - jax.random.uniform(ks[1], (N,), jnp.float32, 0.0, 10.0)
    mem_input = jax.random.normal(ks[2], (N, dim_message), jnp.float32)
    mem = jax.random.normal(ks[3], (N, dim_memory), jnp.float32)
    node_feat = jax.random.normal(ks[4], (N, dim_node), jnp.float32)
    nid = jnp.arange(100, 100 + N, dtype=jnp.int32)
    return ts, mem_ts, mem_input, mem, node_feat, nid


if __name__ == "__main__":
    # Module hyper-parameters (dim_node != dim_memory -> node_feat_proj branch).
    dim_node, dim_edge, dim_time, dim_embed, dim_memory = 12, 8, 16, 32, 32
    dim_message = 2 * dim_memory + dim_edge            # 72
    dim_input = dim_message + dim_time                 # 88

    key = jax.random.PRNGKey(0)
    kp, kd1, kd2 = jax.random.split(key, 3)
    ks = jax.random.split(kp, 5)

    # Deterministic parameters.
    params = {
        # TimeEncode (JODIE/TGN fixed init): w = 1/10^linspace(0,9,dim_time), b = 0
        "time_w": jnp.asarray(1.0 / (10.0 ** np.linspace(0, 9, dim_time)),
                              dtype=jnp.float32),
        "time_b": jnp.zeros((dim_time,), jnp.float32),
        # RNNCell parameters (PyTorch shapes: W_ih (H, In), W_hh (H, H)).
        "w_ih": 0.1 * jax.random.normal(ks[0], (dim_memory, dim_input), jnp.float32),
        "b_ih": 0.1 * jax.random.normal(ks[1], (dim_memory,), jnp.float32),
        "w_hh": 0.1 * jax.random.normal(ks[2], (dim_memory, dim_memory), jnp.float32),
        "b_hh": 0.05 * jax.random.normal(ks[3], (dim_memory,), jnp.float32),
        # node_feat_proj: Linear(dim_node, dim_memory)
        "w_proj": 0.1 * jax.random.normal(ks[4], (dim_memory, dim_node), jnp.float32),
        "b_proj": 0.1 * jax.random.normal(jax.random.fold_in(ks[4], 1),
                                          (dim_memory,), jnp.float32),
    }

    # --- case 1: small block, N multiple of 8 (grid of 2 tiles of 8 rows) ----
    N1, ndst1 = 16, 8
    ts, mem_ts, mem_input, mem, node_feat, nid = _make_inputs(
        kd1, N1, dim_message, dim_memory, dim_node)
    out = rnn_memory_updater_forward(ts, mem_ts, mem_input, mem, node_feat,
                                     nid, params, ndst1)
    jax.block_until_ready(out)
    ref_upd, ref_h = _reference(ts, mem_ts, mem_input, mem, node_feat, params)
    np.testing.assert_allclose(np.asarray(out["updated_memory"]),
                               np.asarray(ref_upd), rtol=1e-5, atol=1e-5)
    np.testing.assert_allclose(np.asarray(out["h"]),
                               np.asarray(ref_h), rtol=1e-5, atol=1e-5)
    np.testing.assert_allclose(np.asarray(out["last_updated_memory"]),
                               np.asarray(ref_upd[:ndst1]), rtol=1e-5, atol=1e-5)
    assert out["last_updated_nid"].shape == (ndst1,)
    assert out["last_updated_ts"].shape == (ndst1,)

    # --- case 2: N not a multiple of 8 -> exercises padding + larger tile ----
    N2, ndst2 = 100, 37
    ts, mem_ts, mem_input, mem, node_feat, nid = _make_inputs(
        kd2, N2, dim_message, dim_memory, dim_node)
    out2 = rnn_memory_updater_forward(ts, mem_ts, mem_input, mem, node_feat,
                                      nid, params, ndst2)
    jax.block_until_ready(out2)
    ref_upd2, ref_h2 = _reference(ts, mem_ts, mem_input, mem, node_feat, params)
    np.testing.assert_allclose(np.asarray(out2["updated_memory"]),
                               np.asarray(ref_upd2), rtol=1e-5, atol=1e-5)
    np.testing.assert_allclose(np.asarray(out2["h"]),
                               np.asarray(ref_h2), rtol=1e-5, atol=1e-5)
    np.testing.assert_allclose(np.asarray(out2["last_updated_memory"]),
                               np.asarray(ref_upd2[:ndst2]), rtol=1e-5, atol=1e-5)
    assert out2["last_updated_nid"].shape == (ndst2,)
    assert out2["last_updated_ts"].shape == (ndst2,)

    print("KERNEL_OK")
</pallas_src>

<mosaic_0001>
module attributes {stable_mosaic.version = 11 : i64} {
  func.func @_updater_kernel(%arg0: i32, %arg1: memref<8x1xf32, #tpu.memory_space<vmem>>, %arg2: memref<8x72xf32, #tpu.memory_space<vmem>>, %arg3: memref<8x32xf32, #tpu.memory_space<vmem>>, %arg4: memref<8x12xf32, #tpu.memory_space<vmem>>, %arg5: memref<1x16xf32, #tpu.memory_space<vmem>>, %arg6: memref<1x16xf32, #tpu.memory_space<vmem>>, %arg7: memref<72x32xf32, #tpu.memory_space<vmem>>, %arg8: memref<16x32xf32, #tpu.memory_space<vmem>>, %arg9: memref<32x32xf32, #tpu.memory_space<vmem>>, %arg10: memref<1x32xf32, #tpu.memory_space<vmem>>, %arg11: memref<12x32xf32, #tpu.memory_space<vmem>>, %arg12: memref<1x32xf32, #tpu.memory_space<vmem>>, %arg13: memref<8x32xf32, #tpu.memory_space<vmem>>, %arg14: memref<8x32xf32, #tpu.memory_space<vmem>>) attributes {dimension_semantics = [#tpu.dimension_semantics<parallel>], iteration_bounds = array<i64: 2>, scalar_prefetch = 0 : i64, scratch_operands = 0 : i64, tpu.core_type = #tpu.core_type<tc>, window_params = [{transform_indices = @transform_0, window_bounds = array<i64: 8, 1>}, {transform_indices = @transform_1, window_bounds = array<i64: 8, 72>}, {transform_indices = @transform_2, window_bounds = array<i64: 8, 32>}, {transform_indices = @transform_3, window_bounds = array<i64: 8, 12>}, {pipeline_mode = #tpu.pipeline_mode<synchronous>, transform_indices = @transform_4, window_bounds = array<i64: 1, 16>}, {pipeline_mode = #tpu.pipeline_mode<synchronous>, transform_indices = @transform_5, window_bounds = array<i64: 1, 16>}, {pipeline_mode = #tpu.pipeline_mode<synchronous>, transform_indices = @transform_6, window_bounds = array<i64: 72, 32>}, {pipeline_mode = #tpu.pipeline_mode<synchronous>, transform_indices = @transform_7, window_bounds = array<i64: 16, 32>}, {pipeline_mode = #tpu.pipeline_mode<synchronous>, transform_indices = @transform_8, window_bounds = array<i64: 32, 32>}, {pipeline_mode = #tpu.pipeline_mode<synchronous>, transform_indices = @transform_9, window_bounds = array<i64: 1, 32>}, {pipeline_mode = #tpu.pipeline_mode<synchronous>, transform_indices = @transform_10, window_bounds = array<i64: 12, 32>}, {pipeline_mode = #tpu.pipeline_mode<synchronous>, transform_indices = @transform_11, window_bounds = array<i64: 1, 32>}, {transform_indices = @transform_12, window_bounds = array<i64: 8, 32>}, {transform_indices = @transform_13, window_bounds = array<i64: 8, 32>}]} {
    %c0 = arith.constant 0 : index
    %c0_0 = arith.constant 0 : index
    %0 = vector.load %arg1[%c0, %c0_0] : memref<8x1xf32, #tpu.memory_space<vmem>>, vector<8x1xf32>
    %c0_1 = arith.constant 0 : index
    %c0_2 = arith.constant 0 : index
    %1 = vector.load %arg5[%c0_1, %c0_2] : memref<1x16xf32, #tpu.memory_space<vmem>>, vector<1x16xf32>
    %2 = vector.broadcast %0 : vector<8x1xf32> to vector<8x16xf32>
    %3 = vector.broadcast %1 : vector<1x16xf32> to vector<8x16xf32>
    %4 = arith.mulf %2, %3 : vector<8x16xf32>
    %c0_3 = arith.constant 0 : index
    %c0_4 = arith.constant 0 : index
    %5 = vector.load %arg6[%c0_3, %c0_4] : memref<1x16xf32, #tpu.memory_space<vmem>>, vector<1x16xf32>
    %6 = vector.broadcast %5 : vector<1x16xf32> to vector<8x16xf32>
    %7 = arith.addf %4, %6 : vector<8x16xf32>
    %8 = math.cos %7 : vector<8x16xf32>
    %c0_5 = arith.constant 0 : index
    %c0_6 = arith.constant 0 : index
    %9 = vector.load %arg2[%c0_5, %c0_6] : memref<8x72xf32, #tpu.memory_space<vmem>>, vector<8x72xf32>
    %c0_7 = arith.constant 0 : index
    %c0_8 = arith.constant 0 : index
    %10 = vector.load %arg7[%c0_7, %c0_8] : memref<72x32xf32, #tpu.memory_space<vmem>>, vector<72x32xf32>
    %cst = arith.constant dense<0.000000e+00> : vector<8x32xf32>
    %11 = tpu.matmul %9, %10, %cst {dimension_numbers = #tpu.dot_dimension_numbers<[1], [0], [0], [1], [0, 0, 1, 1], [], []>} : vector<8x72xf32>, vector<72x32xf32>, vector<8x32xf32> -> vector<8x32xf32>
    %c0_9 = arith.constant 0 : index
    %c0_10 = arith.constant 0 : index
    %12 = vector.load %arg8[%c0_9, %c0_10] : memref<16x32xf32, #tpu.memory_space<vmem>>, vector<16x32xf32>
    %cst_11 = arith.constant dense<0.000000e+00> : vector<8x32xf32>
    %13 = tpu.matmul %8, %12, %cst_11 {dimension_numbers = #tpu.dot_dimension_numbers<[1], [0], [0], [1], [0, 0, 1, 1], [], []>} : vector<8x16xf32>, vector<16x32xf32>, vector<8x32xf32> -> vector<8x32xf32>
    %14 = arith.addf %11, %13 : vector<8x32xf32>
    %c0_12 = arith.constant 0 : index
    %c0_13 = arith.constant 0 : index
    %15 = vector.load %arg3[%c0_12, %c0_13] : memref<8x32xf32, #tpu.memory_space<vmem>>, vector<8x32xf32>
    %c0_14 = arith.constant 0 : index
    %c0_15 = arith.constant 0 : index
    %16 = vector.load %arg9[%c0_14, %c0_15] : memref<32x32xf32, #tpu.memory_space<vmem>>, vector<32x32xf32>
    %cst_16 = arith.constant dense<0.000000e+00> : vector<8x32xf32>
    %17 = tpu.matmul %15, %16, %cst_16 {dimension_numbers = #tpu.dot_dimension_numbers<[1], [0], [0], [1], [0, 0, 1, 1], [], []>} : vector<8x32xf32>, vector<32x32xf32>, vector<8x32xf32> -> vector<8x32xf32>
    %18 = arith.addf %14, %17 : vector<8x32xf32>
    %c0_17 = arith.constant 0 : index
    %c0_18 = arith.constant 0 : index
    %19 = vector.load %arg10[%c0_17, %c0_18] : memref<1x32xf32, #tpu.memory_space<vmem>>, vector<1x32xf32>
    %20 = vector.broadcast %19 : vector<1x32xf32> to vector<8x32xf32>
    %21 = arith.addf %18, %20 : vector<8x32xf32>
    %22 = math.tanh %21 : vector<8x32xf32>
    %c0_19 = arith.constant 0 : index
    %c0_20 = arith.constant 0 : index
    %23 = vector.load %arg13[%c0_19, %c0_20] : memref<8x32xf32, #tpu.memory_space<vmem>>, vector<8x32xf32>
    tpu.vector_store %arg13[%c0_19, %c0_20], %22 {strides = array<i32>} : memref<8x32xf32, #tpu.memory_space<vmem>>, vector<8x32xf32>,
    %c0_21 = arith.constant 0 : index
    %c0_22 = arith.constant 0 : index
    %24 = vector.load %arg4[%c0_21, %c0_22] : memref<8x12xf32, #tpu.memory_space<vmem>>, vector<8x12xf32>
    %c0_23 = arith.constant 0 : index
    %c0_24 = arith.constant 0 : index
    %25 = vector.load %arg11[%c0_23, %c0_24] : memref<12x32xf32, #tpu.memory_space<vmem>>, vector<12x32xf32>
    %cst_25 = arith.constant dense<0.000000e+00> : vector<8x32xf32>
    %26 = tpu.matmul %24, %25, %cst_25 {dimension_numbers = #tpu.dot_dimension_numbers<[1], [0], [0], [1], [0, 0, 1, 1], [], []>} : vector<8x12xf32>, vector<12x32xf32>, vector<8x32xf32> -> vector<8x32xf32>
    %27 = arith.addf %22, %26 : vector<8x32xf32>
    %c0_26 = arith.constant 0 : index
    %c0_27 = arith.constant 0 : index
    %28 = vector.load %arg12[%c0_26, %c0_27] : memref<1x32xf32, #tpu.memory_space<vmem>>, vector<1x32xf32>
    %29 = vector.broadcast %28 : vector<1x32xf32> to vector<8x32xf32>
    %30 = arith.addf %27, %29 : vector<8x32xf32>
    %c0_28 = arith.constant 0 : index
    %c0_29 = arith.constant 0 : index
    %31 = vector.load %arg14[%c0_28, %c0_29] : memref<8x32xf32, #tpu.memory_space<vmem>>, vector<8x32xf32>
    tpu.vector_store %arg14[%c0_28, %c0_29], %30 {strides = array<i32>} : memref<8x32xf32, #tpu.memory_space<vmem>>, vector<8x32xf32>,
    return
  }
  func.func @transform_0(%arg0: i32) -> (i32, i32) {
    %c0_i32 = arith.constant 0 : i32
    %c0_i32_0 = arith.constant 0 : i32
    return %arg0, %c0_i32 : i32, i32
  }
  func.func @transform_1(%arg0: i32) -> (i32, i32) {
    %c0_i32 = arith.constant 0 : i32
    %c0_i32_0 = arith.constant 0 : i32
    return %arg0, %c0_i32 : i32, i32
  }
  func.func @transform_2(%arg0: i32) -> (i32, i32) {
    %c0_i32 = arith.constant 0 : i32
    %c0_i32_0 = arith.constant 0 : i32
    return %arg0, %c0_i32 : i32, i32
  }
  func.func @transform_3(%arg0: i32) -> (i32, i32) {
    %c0_i32 = arith.constant 0 : i32
    %c0_i32_0 = arith.constant 0 : i32
    return %arg0, %c0_i32 : i32, i32
  }
  func.func @transform_4(%arg0: i32) -> (i32, i32) {
    %c0_i32 = arith.constant 0 : i32
    %c0_i32_0 = arith.constant 0 : i32
    %c0_i32_1 = arith.constant 0 : i32
    return %c0_i32, %c0_i32_0 : i32, i32
  }
  func.func @transform_5(%arg0: i32) -> (i32, i32) {
    %c0_i32 = arith.constant 0 : i32
    %c0_i32_0 = arith.constant 0 : i32
    %c0_i32_1 = arith.constant 0 : i32
    return %c0_i32, %c0_i32_0 : i32, i32
  }
  func.func @transform_6(%arg0: i32) -> (i32, i32) {
    %c0_i32 = arith.constant 0 : i32
    %c0_i32_0 = arith.constant 0 : i32
    %c0_i32_1 = arith.constant 0 : i32
    return %c0_i32, %c0_i32_0 : i32, i32
  }
  func.func @transform_7(%arg0: i32) -> (i32, i32) {
    %c0_i32 = arith.constant 0 : i32
    %c0_i32_0 = arith.constant 0 : i32
    %c0_i32_1 = arith.constant 0 : i32
    return %c0_i32, %c0_i32_0 : i32, i32
  }
  func.func @transform_8(%arg0: i32) -> (i32, i32) {
    %c0_i32 = arith.constant 0 : i32
    %c0_i32_0 = arith.constant 0 : i32
    %c0_i32_1 = arith.constant 0 : i32
    return %c0_i32, %c0_i32_0 : i32, i32
  }
  func.func @transform_9(%arg0: i32) -> (i32, i32) {
    %c0_i32 = arith.constant 0 : i32
    %c0_i32_0 = arith.constant 0 : i32
    %c0_i32_1 = arith.constant 0 : i32
    return %c0_i32, %c0_i32_0 : i32, i32
  }
  func.func @transform_10(%arg0: i32) -> (i32, i32) {
    %c0_i32 = arith.constant 0 : i32
    %c0_i32_0 = arith.constant 0 : i32
    %c0_i32_1 = arith.constant 0 : i32
    return %c0_i32, %c0_i32_0 : i32, i32
  }
  func.func @transform_11(%arg0: i32) -> (i32, i32) {
    %c0_i32 = arith.constant 0 : i32
    %c0_i32_0 = arith.constant 0 : i32
    %c0_i32_1 = arith.constant 0 : i32
    return %c0_i32, %c0_i32_0 : i32, i32
  }
  func.func @transform_12(%arg0: i32) -> (i32, i32) {
    %c0_i32 = arith.constant 0 : i32
    %c0_i32_0 = arith.constant 0 : i32
    return %arg0, %c0_i32 : i32, i32
  }
  func.func @transform_13(%arg0: i32) -> (i32, i32) {
    %c0_i32 = arith.constant 0 : i32
    %c0_i32_0 = arith.constant 0 : i32
    return %arg0, %c0_i32 : i32, i32
  }
}

</mosaic_0001>

<llo_original>
// kernel: tpu_custom_call.1
$region0: #{tpu_custom_call.1}
  #allocation0 [shape = 'u32[]', space=smem, size = 0x4, offset = 0x4, fixed_abs, tag = 'smem constant byte address 0x4 - core index']
  #allocation1 [shape = 'u32[144,128]{1,0:T(1,128)}', space=vmem, size = 0x12000, scoped, tag = 'internal scratch']
  %s0 = inlined_call_operand.vmem [shape: f32[16,1], index: 0, kind: input, shape index: {}]
  %s1 = inlined_call_operand.vmem [shape: f32[16,72], index: 1, kind: input, shape index: {}]
  %s2 = inlined_call_operand.vmem [shape: f32[16,32], index: 2, kind: input, shape index: {}]
  %s3 = inlined_call_operand.vmem [shape: f32[16,12], index: 3, kind: input, shape index: {}]
  %s4 = inlined_call_operand.vmem [shape: f32[1,16], index: 4, kind: input, shape index: {}]
  %s5 = inlined_call_operand.vmem [shape: f32[1,16], index: 5, kind: input, shape index: {}]
  %s6 = inlined_call_operand.vmem [shape: f32[72,32], index: 6, kind: input, shape index: {}]
  %s7 = inlined_call_operand.vmem [shape: f32[16,32], index: 7, kind: input, shape index: {}]
  %s8 = inlined_call_operand.vmem [shape: f32[32,32], index: 8, kind: input, shape index: {}]
  %s9 = inlined_call_operand.vmem [shape: f32[1,32], index: 9, kind: input, shape index: {}]
  %s10 = inlined_call_operand.vmem [shape: f32[12,32], index: 10, kind: input, shape index: {}]
  %s11 = inlined_call_operand.vmem [shape: f32[1,32], index: 11, kind: input, shape index: {}]
  %s12 = inlined_call_operand.hbm [shape: f32[16,32], index: 12, kind: output, shape index: {0}]
  %s13 = inlined_call_operand.hbm [shape: f32[16,32], index: 13, kind: output, shape index: {1}]
  %14 = xla_tuple %s12, %s13
  %s15 = sld [smem:[#allocation0]]
  $region89: #{tpu_custom_call.1} parent=0
    _
  %s17 = ssub.s32 1, %s15
  %s18 = scalar_select 0, %s17, %s15
  $region1: #{tpu_custom_call.1} parent=0
    #allocation2 [shape = 'u8[8192]{0}', space=vmem, size = 0x2000, scoped, tag = 'output window, operand 0']
    #allocation3 [shape = 's32[2]{0}', space=sflag, size = 0x8, scoped, tag = 'scoped memory for tpu_custom_call.1']
    #allocation4 [shape = 'u8[8192]{0}', space=vmem, size = 0x2000, scoped, tag = 'output window, operand 1']
    #allocation5 [shape = 's32[2]{0}', space=sflag, size = 0x8, scoped, tag = 'scoped memory for tpu_custom_call.1']
    %19 = vsyncpa [#allocation3], 0
    %s20 = scalar_lea.sflag [#allocation3], 1
    %21 = vsyncpa %s20, 0
    %22 = vsyncpa [#allocation5], 0
    %s23 = scalar_lea.sflag [#allocation5], 1
    %24 = vsyncpa %s23, 0
    loop: start=0, step=1, limit=4
    $region2: #{tpu_custom_call.1} parent=1 // loop_pre_header
      _
    $region3: #{tpu_custom_call.1} parent=1 // loop_header
      %s26 = sphi 0, %s30
      %p27 = scmp.ge.s32.totalorder %s26, 4
      %s36 = sphi 0, %s38
      %s39 = sphi 0, %s36
      %s40 = sphi 0, %s39
      %s56 = sphi 0, %s40
      %s62 = sphi 0, %s64
      %s65 = sphi 0, %s62
      %s66 = sphi 0, %s65
      %s82 = sphi 0, %s66
      %s88 = sphi 0, %s90
      %s91 = sphi 0, %s88
      %s92 = sphi 0, %s91
      %s108 = sphi 0, %s92
      %s114 = sphi 0, %s116
      %s117 = sphi 0, %s114
      %s118 = sphi 0, %s117
      %s134 = sphi 0, %s118
      %s138 = sphi 0, %s138
      %s140 = sphi 0, %s138
      %s141 = sphi 0, %s140
      %s155 = sphi 0, %s141
      %s159 = sphi 0, %s159
      %s161 = sphi 0, %s159
      %s162 = sphi 0, %s161
      %s176 = sphi 0, %s162
      %s180 = sphi 0, %s180
      %s182 = sphi 0, %s180
      %s183 = sphi 0, %s182
      %s197 = sphi 0, %s183
      %s201 = sphi 0, %s201
      %s203 = sphi 0, %s201
      %s204 = sphi 0, %s203
      %s218 = sphi 0, %s204
      %s222 = sphi 0, %s222
      %s224 = sphi 0, %s222
      %s225 = sphi 0, %s224
      %s239 = sphi 0, %s225
      %s243 = sphi 0, %s243
      %s245 = sphi 0, %s243
      %s246 = sphi 0, %s245
      %s260 = sphi 0, %s246
      %s264 = sphi 0, %s264
      %s266 = sphi 0, %s264
      %s267 = sphi 0, %s266
      %s281 = sphi 0, %s267
      %s285 = sphi 0, %s285
      %s287 = sphi 0, %s285
      %s288 = sphi 0, %s287
      %s302 = sphi 0, %s288
      %s308 = sphi 0, %s310
      %s311 = sphi 0, %s308
      %s312 = sphi 0, %s311
      %s328 = sphi 0, %s312
      %s334 = sphi 0, %s336
      %s337 = sphi 0, %s334
      %s338 = sphi 0, %s337
      %s354 = sphi 0, %s338
    $region4: #{tpu_custom_call.1} parent=1 // loop_header_branch
      %29 = sbr.rel (%p27) target = $region8
    $region5: #{tpu_custom_call.1} parent=1 // loop_body
      %s31 = ssub.s32 %s26, 1
      %s32 = ssub.s32 %s26, 2
      %s33 = sadd.s32 %s26, 1
      %s34 = ssub.s32 %s26, %s33
      %p35 = scmp.eq.s32.totalorder %s34, 0
      %s37 = sadd.s32 %s36, 1
      %s38 = scalar_select %p35, %s36, %s37
      %p41 = pneg %p35
      %p42 = scmp.eq.s32.totalorder %s26, 1
      %p43 = por %p41, %p42
      %p44 = scmp.ne.s32.totalorder %s36, %s39
      %p45 = scmp.eq.s32.totalorder %s26, 0
      %p46 = por %p44, %p45
      %p47 = scmp.ne.s32.totalorder %s36, %s39
      %p48 = scmp.eq.s32.totalorder %s31, 1
      %p49 = por %p47, %p48
      %p50 = scmp.ne.s32.totalorder %s39, %s40
      %p51 = scmp.eq.s32.totalorder %s31, 0
      %p52 = por %p50, %p51
      %p53 = scmp.ne.s32.totalorder %s39, %s40
      %p54 = scmp.eq.s32.totalorder %s32, 1
      %p55 = por %p53, %p54
      %p57 = scmp.ne.s32.totalorder %s40, %s56
      %p58 = scmp.eq.s32.totalorder %s32, 0
      %p59 = por %p57, %p58
      %s60 = ssub.s32 %s26, %s33
      %p61 = scmp.eq.s32.totalorder %s60, 0
      %s63 = sadd.s32 %s62, 1
      %s64 = scalar_select %p61, %s62, %s63
      %p67 = pneg %p61
      %p68 = scmp.eq.s32.totalorder %s26, 1
      %p69 = por %p67, %p68
      %p70 = scmp.ne.s32.totalorder %s62, %s65
      %p71 = scmp.eq.s32.totalorder %s26, 0
      %p72 = por %p70, %p71
      %p73 = scmp.ne.s32.totalorder %s62, %s65
      %p74 = scmp.eq.s32.totalorder %s31, 1
      %p75 = por %p73, %p74
      %p76 = scmp.ne.s32.totalorder %s65, %s66
      %p77 = scmp.eq.s32.totalorder %s31, 0
      %p78 = por %p76, %p77
      %p79 = scmp.ne.s32.totalorder %s65, %s66
      %p80 = scmp.eq.s32.totalorder %s32, 1
      %p81 = por %p79, %p80
      %p83 = scmp.ne.s32.totalorder %s66, %s82
      %p84 = scmp.eq.s32.totalorder %s32, 0
      %p85 = por %p83, %p84
      %s86 = ssub.s32 %s26, %s33
      %p87 = scmp.eq.s32.totalorder %s86, 0
      %s89 = sadd.s32 %s88, 1
      %s90 = scalar_select %p87, %s88, %s89
      %p93 = pneg %p87
      %p94 = scmp.eq.s32.totalorder %s26, 1
      %p95 = por %p93, %p94
      %p96 = scmp.ne.s32.totalorder %s88, %s91
      %p97 = scmp.eq.s32.totalorder %s26, 0
      %p98 = por %p96, %p97
      %p99 = scmp.ne.s32.totalorder %s88, %s91
      %p100 = scmp.eq.s32.totalorder %s31, 1
      %p101 = por %p99, %p100
      %p102 = scmp.ne.s32.totalorder %s91, %s92
      %p103 = scmp.eq.s32.totalorder %s31, 0
      %p104 = por %p102, %p103
      %p105 = scmp.ne.s32.totalorder %s91, %s92
      %p106 = scmp.eq.s32.totalorder %s32, 1
      %p107 = por %p105, %p106
      %p109 = scmp.ne.s32.totalorder %s92, %s108
      %p110 = scmp.eq.s32.totalorder %s32, 0
      %p111 = por %p109, %p110
      %s112 = ssub.s32 %s26, %s33
      %p113 = scmp.eq.s32.totalorder %s112, 0
      %s115 = sadd.s32 %s114, 1
      %s116 = scalar_select %p113, %s114, %s115
      %p119 = pneg %p113
      %p120 = scmp.eq.s32.totalorder %s26, 1
      %p121 = por %p119, %p120
      %p122 = scmp.ne.s32.totalorder %s114, %s117
      %p123 = scmp.eq.s32.totalorder %s26, 0
      %p124 = por %p122, %p123
      %p125 = scmp.ne.s32.totalorder %s114, %s117
      %p126 = scmp.eq.s32.totalorder %s31, 1
      %p127 = por %p125, %p126
      %p128 = scmp.ne.s32.totalorder %s117, %s118
      %p129 = scmp.eq.s32.totalorder %s31, 0
      %p130 = por %p128, %p129
      %p131 = scmp.ne.s32.totalorder %s117, %s118
      %p132 = scmp.eq.s32.totalorder %s32, 1
      %p133 = por %p131, %p132
      %p135 = scmp.ne.s32.totalorder %s118, %s134
      %p136 = scmp.eq.s32.totalorder %s32, 0
      %p137 = por %p135, %p136
      %s139 = sadd.s32 %s138, 1
      %p142 = scmp.eq.s32.totalorder %s26, 1
      %p143 = scmp.ne.s32.totalorder %s138, %s140
      %p144 = scmp.eq.s32.totalorder %s26, 0
      %p145 = por %p143, %p144
      %p146 = scmp.ne.s32.totalorder %s138, %s140
      %p147 = scmp.eq.s32.totalorder %s31, 1
      %p148 = por %p146, %p147
      %p149 = scmp.ne.s32.totalorder %s140, %s141
      %p150 = scmp.eq.s32.totalorder %s31, 0
      %p151 = por %p149, %p150
      %p152 = scmp.ne.s32.totalorder %s140, %s141
      %p153 = scmp.eq.s32.totalorder %s32, 1
      %p154 = por %p152, %p153
      %p156 = scmp.ne.s32.totalorder %s141, %s155
      %p157 = scmp.eq.s32.totalorder %s32, 0
      %p158 = por %p156, %p157
      %s160 = sadd.s32 %s159, 1
      %p163 = scmp.eq.s32.totalorder %s26, 1
      %p164 = scmp.ne.s32.totalorder %s159, %s161
      %p165 = scmp.eq.s32.totalorder %s26, 0
      %p166 = por %p164, %p165
      %p167 = scmp.ne.s32.totalorder %s159, %s161
      %p168 = scmp.eq.s32.totalorder %s31, 1
      %p169 = por %p167, %p168
      %p170 = scmp.ne.s32.totalorder %s161, %s162
      %p171 = scmp.eq.s32.totalorder %s31, 0
      %p172 = por %p170, %p171
      %p173 = scmp.ne.s32.totalorder %s161, %s162
      %p174 = scmp.eq.s32.totalorder %s32, 1
      %p175 = por %p173, %p174
      %p177 = scmp.ne.s32.totalorder %s162, %s176
      %p178 = scmp.eq.s32.totalorder %s32, 0
      %p179 = por %p177, %p178
      %s181 = sadd.s32 %s180, 1
      %p184 = scmp.eq.s32.totalorder %s26, 1
      %p185 = scmp.ne.s32.totalorder %s180, %s182
      %p186 = scmp.eq.s32.totalorder %s26, 0
      %p187 = por %p185, %p186
      %p188 = scmp.ne.s32.totalorder %s180, %s182
      %p189 = scmp.eq.s32.totalorder %s31, 1
      %p190 = por %p188, %p189
      %p191 = scmp.ne.s32.totalorder %s182, %s183
      %p192 = scmp.eq.s32.totalorder %s31, 0
      %p193 = por %p191, %p192
      %p194 = scmp.ne.s32.totalorder %s182, %s183
      %p195 = scmp.eq.s32.totalorder %s32, 1
      %p196 = por %p194, %p195
      %p198 = scmp.ne.s32.totalorder %s183, %s197
      %p199 = scmp.eq.s32.totalorder %s32, 0
      %p200 = por %p198, %p199
      %s202 = sadd.s32 %s201, 1
      %p205 = scmp.eq.s32.totalorder %s26, 1
      %p206 = scmp.ne.s32.totalorder %s201, %s203
      %p207 = scmp.eq.s32.totalorder %s26, 0
      %p208 = por %p206, %p207
      %p209 = scmp.ne.s32.totalorder %s201, %s203
      %p210 = scmp.eq.s32.totalorder %s31, 1
      %p211 = por %p209, %p210
      %p212 = scmp.ne.s32.totalorder %s203, %s204
      %p213 = scmp.eq.s32.totalorder %s31, 0
      %p214 = por %p212, %p213
      %p215 = scmp.ne.s32.totalorder %s203, %s204
      %p216 = scmp.eq.s32.totalorder %s32, 1
      %p217 = por %p215, %p216
      %p219 = scmp.ne.s32.totalorder %s204, %s218
      %p220 = scmp.eq.s32.totalorder %s32, 0
      %p221 = por %p219, %p220
      %s223 = sadd.s32 %s222, 1
      %p226 = scmp.eq.s32.totalorder %s26, 1
      %p227 = scmp.ne.s32.totalorder %s222, %s224
      %p228 = scmp.eq.s32.totalorder %s26, 0
      %p229 = por %p227, %p228
      %p230 = scmp.ne.s32.totalorder %s222, %s224
      %p231 = scmp.eq.s32.totalorder %s31, 1
      %p232 = por %p230, %p231
      %p233 = scmp.ne.s32.totalorder %s224, %s225
      %p234 = scmp.eq.s32.totalorder %s31, 0
      %p235 = por %p233, %p234
      %p236 = scmp.ne.s32.totalorder %s224, %s225
      %p237 = scmp.eq.s32.totalorder %s32, 1
      %p238 = por %p236, %p237
      %p240 = scmp.ne.s32.totalorder %s225, %s239
      %p241 = scmp.eq.s32.totalorder %s32, 0
      %p242 = por %p240, %p241
      %s244 = sadd.s32 %s243, 1
      %p247 = scmp.eq.s32.totalorder %s26, 1
      %p248 = scmp.ne.s32.totalorder %s243, %s245
      %p249 = scmp.eq.s32.totalorder %s26, 0
      %p250 = por %p248, %p249
      %p251 = scmp.ne.s32.totalorder %s243, %s245
      %p252 = scmp.eq.s32.totalorder %s31, 1
      %p253 = por %p251, %p252
      %p254 = scmp.ne.s32.totalorder %s245, %s246
      %p255 = scmp.eq.s32.totalorder %s31, 0
      %p256 = por %p254, %p255
      %p257 = scmp.ne.s32.totalorder %s245, %s246
      %p258 = scmp.eq.s32.totalorder %s32, 1
      %p259 = por %p257, %p258
      %p261 = scmp.ne.s32.totalorder %s246, %s260
      %p262 = scmp.eq.s32.totalorder %s32, 0
      %p263 = por %p261, %p262
      %s265 = sadd.s32 %s264, 1
      %p268 = scmp.eq.s32.totalorder %s26, 1
      %p269 = scmp.ne.s32.totalorder %s264, %s266
      %p270 = scmp.eq.s32.totalorder %s26, 0
      %p271 = por %p269, %p270
      %p272 = scmp.ne.s32.totalorder %s264, %s266
      %p273 = scmp.eq.s32.totalorder %s31, 1
      %p274 = por %p272, %p273
      %p275 = scmp.ne.s32.totalorder %s266, %s267
      %p276 = scmp.eq.s32.totalorder %s31, 0
      %p277 = por %p275, %p276
      %p278 = scmp.ne.s32.totalorder %s266, %s267
      %p279 = scmp.eq.s32.totalorder %s32, 1
      %p280 = por %p278, %p279
      %p282 = scmp.ne.s32.totalorder %s267, %s281
      %p283 = scmp.eq.s32.totalorder %s32, 0
      %p284 = por %p282, %p283
      %s286 = sadd.s32 %s285, 1
      %p289 = scmp.eq.s32.totalorder %s26, 1
      %p290 = scmp.ne.s32.totalorder %s285, %s287
      %p291 = scmp.eq.s32.totalorder %s26, 0
      %p292 = por %p290, %p291
      %p293 = scmp.ne.s32.totalorder %s285, %s287
      %p294 = scmp.eq.s32.totalorder %s31, 1
      %p295 = por %p293, %p294
      %p296 = scmp.ne.s32.totalorder %s287, %s288
      %p297 = scmp.eq.s32.totalorder %s31, 0
      %p298 = por %p296, %p297
      %p299 = scmp.ne.s32.totalorder %s287, %s288
      %p300 = scmp.eq.s32.totalorder %s32, 1
      %p301 = por %p299, %p300
      %p303 = scmp.ne.s32.totalorder %s288, %s302
      %p304 = scmp.eq.s32.totalorder %s32, 0
      %p305 = por %p303, %p304
      %s306 = ssub.s32 %s26, %s33
      %p307 = scmp.eq.s32.totalorder %s306, 0
      %s309 = sadd.s32 %s308, 1
      %s310 = scalar_select %p307, %s308, %s309
      %p313 = pneg %p307
      %p314 = scmp.eq.s32.totalorder %s26, 1
      %p315 = por %p313, %p314
      %p316 = scmp.ne.s32.totalorder %s308, %s311
      %p317 = scmp.eq.s32.totalorder %s26, 0
      %p318 = por %p316, %p317
      %p319 = scmp.ne.s32.totalorder %s308, %s311
      %p320 = scmp.eq.s32.totalorder %s31, 1
      %p321 = por %p319, %p320
      %p322 = scmp.ne.s32.totalorder %s311, %s312
      %p323 = scmp.eq.s32.totalorder %s31, 0
      %p324 = por %p322, %p323
      %p325 = scmp.ne.s32.totalorder %s311, %s312
      %p326 = scmp.eq.s32.totalorder %s32, 1
      %p327 = por %p325, %p326
      %p329 = scmp.ne.s32.totalorder %s312, %s328
      %p330 = scmp.eq.s32.totalorder %s32, 0
      %p331 = por %p329, %p330
      %s332 = ssub.s32 %s26, %s33
      %p333 = scmp.eq.s32.totalorder %s332, 0
      %s335 = sadd.s32 %s334, 1
      %s336 = scalar_select %p333, %s334, %s335
      %p339 = pneg %p333
      %p340 = scmp.eq.s32.totalorder %s26, 1
      %p341 = por %p339, %p340
      %p342 = scmp.ne.s32.totalorder %s334, %s337
      %p343 = scmp.eq.s32.totalorder %s26, 0
      %p344 = por %p342, %p343
      %p345 = scmp.ne.s32.totalorder %s334, %s337
      %p346 = scmp.eq.s32.totalorder %s31, 1
      %p347 = por %p345, %p346
      %p348 = scmp.ne.s32.totalorder %s337, %s338
      %p349 = scmp.eq.s32.totalorder %s31, 0
      %p350 = por %p348, %p349
      %p351 = scmp.ne.s32.totalorder %s337, %s338
      %p352 = scmp.eq.s32.totalorder %s32, 1
      %p353 = por %p351, %p352
      %p355 = scmp.ne.s32.totalorder %s338, %s354
      %p356 = scmp.eq.s32.totalorder %s32, 0
      %p357 = por %p355, %p356
      %p358 = scmp.le.s32.totalorder 1, %s26
      %p359 = scmp.lt.s32.totalorder %s26, 3
      %p360 = pnand %p358, %p359
      %p361 = pneg %p360
      // Predicated region
      $region9: #{tpu_custom_call.1} parent=5 // pred_check
        _
      $region10: #{tpu_custom_call.1} parent=5 // pred_check_branch
        %363 = sbr.rel (%p360) target = $region12
      $region11: #{tpu_custom_call.1} parent=5 // pred_region
        %s364 = ssub.s32 %s26, 1
        // Predicated region
        $region13: #{tpu_custom_call.1} parent=11 // pred_check
          %p365 = pneg %p151
        $region14: #{tpu_custom_call.1} parent=11 // pred_check_branch
          %367 = sbr.rel (%p365) target = $region16
        $region15: #{tpu_custom_call.1} parent=11 // pred_region
          _
        $region16: #{tpu_custom_call.1} parent=11 // pred_fallthru
          _
        // Predicated region
        $region17: #{tpu_custom_call.1} parent=11 // pred_check
          %p368 = pneg %p172
        $region18: #{tpu_custom_call.1} parent=11 // pred_check_branch
          %370 = sbr.rel (%p368) target = $region20
        $region19: #{tpu_custom_call.1} parent=11 // pred_region
          _
        $region20: #{tpu_custom_call.1} parent=11 // pred_fallthru
          _
        // Predicated region
        $region21: #{tpu_custom_call.1} parent=11 // pred_check
          %p371 = pneg %p193
        $region22: #{tpu_custom_call.1} parent=11 // pred_check_branch
          %373 = sbr.rel (%p371) target = $region24
        $region23: #{tpu_custom_call.1} parent=11 // pred_region
          _
        $region24: #{tpu_custom_call.1} parent=11 // pred_fallthru
          _
        // Predicated region
        $region25: #{tpu_custom_call.1} parent=11 // pred_check
          %p374 = pneg %p214
        $region26: #{tpu_custom_call.1} parent=11 // pred_check_branch
          %376 = sbr.rel (%p374) target = $region28
        $region27: #{tpu_custom_call.1} parent=11 // pred_region
          _
        $region28: #{tpu_custom_call.1} parent=11 // pred_fallthru
          _
        // Predicated region
        $region29: #{tpu_custom_call.1} parent=11 // pred_check
          %p377 = pneg %p235
        $region30: #{tpu_custom_call.1} parent=11 // pred_check_branch
          %379 = sbr.rel (%p377) target = $region32
        $region31: #{tpu_custom_call.1} parent=11 // pred_region
          _
        $region32: #{tpu_custom_call.1} parent=11 // pred_fallthru
          _
        // Predicated region
        $region33: #{tpu_custom_call.1} parent=11 // pred_check
          %p380 = pneg %p256
        $region34: #{tpu_custom_call.1} parent=11 // pred_check_branch
          %382 = sbr.rel (%p380) target = $region36
        $region35: #{tpu_custom_call.1} parent=11 // pred_region
          _
        $region36: #{tpu_custom_call.1} parent=11 // pred_fallthru
          _
        // Predicated region
        $region37: #{tpu_custom_call.1} parent=11 // pred_check
          %p383 = pneg %p277
        $region38: #{tpu_custom_call.1} parent=11 // pred_check_branch
          %385 = sbr.rel (%p383) target = $region40
        $region39: #{tpu_custom_call.1} parent=11 // pred_region
          _
        $region40: #{tpu_custom_call.1} parent=11 // pred_fallthru
          _
        // Predicated region
        $region41: #{tpu_custom_call.1} parent=11 // pred_check
          %p386 = pneg %p298
        $region42: #{tpu_custom_call.1} parent=11 // pred_check_branch
          %388 = sbr.rel (%p386) target = $region44
        $region43: #{tpu_custom_call.1} parent=11 // pred_region
          _
        $region44: #{tpu_custom_call.1} parent=11 // pred_fallthru
          _
      $region12: #{tpu_custom_call.1} parent=5 // pred_fallthru
        _
      %p389 = scmp.lt.s32.totalorder %s26, 2
      // Predicated region
      $region45: #{tpu_custom_call.1} parent=5 // pred_check
        %p390 = pneg %p389
      $region46: #{tpu_custom_call.1} parent=5 // pred_check_branch
        %392 = sbr.rel (%p390) target = $region48
      $region47: #{tpu_custom_call.1} parent=5 // pred_region
        // Predicated region
        $region49: #{tpu_custom_call.1} parent=47 // pred_check
          %p393 = pneg %p46
        $region50: #{tpu_custom_call.1} parent=47 // pred_check_branch
          %395 = sbr.rel (%p393) target = $region52
        $region51: #{tpu_custom_call.1} parent=47 // pred_region
          %p396 = scmp.lt.s32.totalorder %s26, 1
          %s397 = scalar_select %p396, %s26, 1
          %s398 = smul.addr %s397, 8
          %s399 = scalar_lea.vmem %s0, %s398
        $region52: #{tpu_custom_call.1} parent=47 // pred_fallthru
          _
        // Predicated region
        $region53: #{tpu_custom_call.1} parent=47 // pred_check
          %p400 = pneg %p72
        $region54: #{tpu_custom_call.1} parent=47 // pred_check_branch
          %402 = sbr.rel (%p400) target = $region56
        $region55: #{tpu_custom_call.1} parent=47 // pred_region
          %p403 = scmp.lt.s32.totalorder %s26, 1
          %s404 = scalar_select %p403, %s26, 1
          %s405 = smul.addr %s404, 8
          %s406 = scalar_lea.vmem %s1, %s405
        $region56: #{tpu_custom_call.1} parent=47 // pred_fallthru
          _
        // Predicated region
        $region57: #{tpu_custom_call.1} parent=47 // pred_check
          %p407 = pneg %p98
        $region58: #{tpu_custom_call.1} parent=47 // pred_check_branch
          %409 = sbr.rel (%p407) target = $region60
        $region59: #{tpu_custom_call.1} parent=47 // pred_region
          %p410 = scmp.lt.s32.totalorder %s26, 1
          %s411 = scalar_select %p410, %s26, 1
          %s412 = smul.addr %s411, 8
          %s413 = scalar_lea.vmem %s2, %s412
        $region60: #{tpu_custom_call.1} parent=47 // pred_fallthru
          _
        // Predicated region
        $region61: #{tpu_custom_call.1} parent=47 // pred_check
          %p414 = pneg %p124
        $region62: #{tpu_custom_call.1} parent=47 // pred_check_branch
          %416 = sbr.rel (%p414) target = $region64
        $region63: #{tpu_custom_call.1} parent=47 // pred_region
          %p417 = scmp.lt.s32.totalorder %s26, 1
          %s418 = scalar_select %p417, %s26, 1
          %s419 = smul.addr %s418, 8
          %s420 = scalar_lea.vmem %s3, %s419
        $region64: #{tpu_custom_call.1} parent=47 // pred_fallthru
          _
      $region48: #{tpu_custom_call.1} parent=5 // pred_fallthru
        _
      %p421 = scmp.le.s32.totalorder 1, %s26
      %p422 = scmp.lt.s32.totalorder %s26, 3
      %p423 = pnand %p421, %p422
      %p424 = pneg %p423
      // Predicated region
      $region65: #{tpu_custom_call.1} parent=5 // pred_check
        _
      $region66: #{tpu_custom_call.1} parent=5 // pred_check_branch
        %426 = sbr.rel (%p423) target = $region68
      $region67: #{tpu_custom_call.1} parent=5 // pred_region
        %s427 = ssub.s32 %s26, 1
        %p428 = scmp.lt.s32.totalorder %s31, 1
        %s429 = scalar_select %p428, %s31, 1
        %s430 = smul.addr %s429, 8
        %s431 = scalar_lea.vmem %s0, %s430
        %p432 = pneg %p52
        %p433 = pneg %p49
        %p434 = scmp.lt.s32.totalorder %s31, 1
        %s435 = scalar_select %p434, %s31, 1
        %s436 = smul.addr %s435, 8
        %s437 = scalar_lea.vmem %s1, %s436
        %p438 = pneg %p78
        %p439 = pneg %p75
        %p440 = scmp.lt.s32.totalorder %s31, 1
        %s441 = scalar_select %p440, %s31, 1
        %s442 = smul.addr %s441, 8
        %s443 = scalar_lea.vmem %s2, %s442
        %p444 = pneg %p104
        %p445 = pneg %p101
        %p446 = scmp.lt.s32.totalorder %s31, 1
        %s447 = scalar_select %p446, %s31, 1
        %s448 = smul.addr %s447, 8
        %s449 = scalar_lea.vmem %s3, %s448
        %p450 = pneg %p130
        %p451 = pneg %p127
        %p452 = pneg %p151
        %p453 = pneg %p148
        %p454 = pneg %p172
        %p455 = pneg %p169
        %p456 = pneg %p193
        %p457 = pneg %p190
        %p458 = pneg %p214
        %p459 = pneg %p211
        %p460 = pneg %p235
        %p461 = pneg %p232
        %p462 = pneg %p256
        %p463 = pneg %p253
        %p464 = pneg %p277
        %p465 = pneg %p274
        %p466 = pneg %p298
        %p467 = pneg %p295
        %p468 = pneg %p324
        %p469 = pneg %p321
        %s470 = sand.u32 %s311, 1
        %s471 = scalar_lea.sflag [#allocation3], %s470
        %s472 = sand.u32 %s311, 1
        %s473 = smul.addr %s472, 8
        %s474 = scalar_lea.vmem [#allocation2], %s473
        %p475 = pneg %p350
        %p476 = pneg %p347
        %s477 = sand.u32 %s337, 1
        %s478 = scalar_lea.sflag [#allocation5], %s477
        %s479 = sand.u32 %s337, 1
        %s480 = smul.addr %s479, 8
        %s481 = scalar_lea.vmem [#allocation4], %s480
        %p482 = scmp.lt.s32.totalorder %s31, 1
        %s483 = scalar_select %p482, %s31, 1
        %s484 = smul.addr %s483, 8
        %s485 = scalar_lea.vmem %s0, %s484
        %p486 = scmp.lt.s32.totalorder %s31, 1
        %s487 = scalar_select %p486, %s31, 1
        %s488 = smul.addr %s487, 8
        %s489 = scalar_lea.vmem %s1, %s488
        %p490 = scmp.lt.s32.totalorder %s31, 1
        %s491 = scalar_select %p490, %s31, 1
        %s492 = smul.addr %s491, 8
        %s493 = scalar_lea.vmem %s2, %s492
        %p494 = scmp.lt.s32.totalorder %s31, 1
        %s495 = scalar_select %p494, %s31, 1
        %s496 = smul.addr %s495, 8
        %s497 = scalar_lea.vmem %s3, %s496
        %v498 = vld [vmem:[%s485] sm:$0xff]
        %v499 = vld [vmem:[%s4] sm:$0x1]
        %501 = vset.pattern.permute.xlu0 0
        %502 = vperm.xlu0 %501, %v498
        %v503 = vpop.permute.xlu0 %502
        %v506 = vlaneseq
        %v507 = vshrl.u32 %v506, 7
        %v508 = vsub.s32 0, %v507
        %v509 = vrot.slane %v499, %v508
        %v511 = vmul.f32 %v503, %v509
        %v512 = vld [vmem:[%s5] sm:$0x1]
        %v514 = vlaneseq
        %v515 = vshrl.u32 %v514, 7
        %v516 = vsub.s32 0, %v515
        %v517 = vrot.slane %v512, %v516
        %v519 = vadd.f32 %v511, %v517
        %v520 = vand.u32 2147483647, %v519
        %vm521 = vcmp.le.f32.partialorder %v520, 0.7853982
        %vm522 = vcmp.lt.s32.totalorder %v519, 0
        %v523 = vand.u32 %v519, 2139095040
        %v524 = vshrl.u32 %v523, 23
        %v525 = vsub.s32 %v524, 127
        %v526 = vand.u32 2147483647, %v519
        %v527 = vand.u32 %v526, 8388607
        %v528 = vor.u32 %v527, 8388608
        %v529 = vsub.s32 0, %v528
        %v530 = vadd.s32 %v525, 1
        %vm531 = vcmp.gt.s32.totalorder %v530, 0
        %v532 = vsel %vm531, %v530, 0
        %v533 = vshrl.u32 %v532, 5
        %v534 = vand.u32 %v532, 31
        %v535 = vsub.s32 32, %v534
        %v536 = vshrl.u32 683565275, %v535
        %v537 = vshll.u32 683565275, %v534
        %v538 = vshrl.u32 2475754826, %v535
        %v539 = vor.u32 %v537, %v538
        %v540 = vshll.u32 2475754826, %v534
        %v541 = vshrl.u32 2131351028, %v535
        %v542 = vor.u32 %v540, %v541
        %v543 = vshll.u32 2131351028, %v534
        %v544 = vshrl.u32 2102212464, %v535
        %v545 = vor.u32 %v543, %v544
        %v546 = vshll.u32 2102212464, %v534
        %v547 = vshrl.u32 920167782, %v535
        %v548 = vor.u32 %v546, %v547
        %v549 = vshll.u32 920167782, %v534
        %v550 = vshrl.u32 1326507024, %v535
        %v551 = vor.u32 %v549, %v550
        %vm552 = vcmp.lt.s32.totalorder %v533, 1
        %vm553 = vcmp.lt.s32.totalorder %v533, 2
        %vm554 = vcmp.lt.s32.totalorder %v533, 3
        %vm555 = vcmp.lt.s32.totalorder %v533, 4
        %v556 = vsel %vm552, %v536, %v539
        %v557 = vsel %vm555, %v545, 2102212464
        %v558 = vsel %vm554, %v542, %v557
        %v559 = vsel %vm553, %v556, %v558
        %v560 = vsel %vm552, %v539, %v542
        %v561 = vsel %vm555, %v548, 920167782
        %v562 = vsel %vm554, %v545, %v561
        %v563 = vsel %vm553, %v560, %v562
        %v564 = vsel %vm552, %v542, %v545
        %v565 = vsel %vm555, %v551, 1326507024
        %v566 = vsel %vm554, %v548, %v565
        %v567 = vsel %vm553, %v564, %v566
        %v568 = vshll.u32 %v528, 8
        %v569 = vmul.u32.u64.compose %v568, %v567
        %v570 = vextract.low.u32 %v569
        %v571 = vextract.high.u32 %v569
        %v572 = vmul.u32.u64.compose %v568, %v563
        %v573 = vextract.low.u32 %v572
        %v574 = vextract.high.u32 %v572
        %v575 = vmul.u32 %v568, %v559
        %v576 = vadd.s32 %v571, %v573
        %vm577 = vc.u32 %v571, %v573
        %v578 = vadd.s32 %v574, 1
        %v579 = vsel %vm577, %v578, %v574
        %v580 = vadd.s32 %v575, %v579
        %v581 = vadd.s32 %v580, 536870912
        %v582 = vshrl.u32 %v581, 30
        %v583 = vshll.u32 %v582, 30
        %v584 = vsub.s32 %v580, %v583
        %vm585 = vcmp.lt.s32.totalorder %v584, 0
        %v586 = vsub.s32 0, %v584
        %v587 = vsel %vm585, %v586, %v584
        %v588 = vclz %v587
        %v589 = vsub.s32 %v588, 2
        %vm590 = vcmp.gt.s32.totalorder 0, %v589
        %v591 = vsel %vm590, 0, %v589
        %v592 = vsub.s32 32, %v591
        %v593 = vshll.u32 %v584, %v591
        %v594 = vshrl.u32 %v576, %v592
        %v595 = vor.u32 %v593, %v594
        %v596 = vsub.s32 4294967266, %v591
        %v597 = vadd.s32 %v596, 127
        %v598 = vshll.u32 %v597, 23
        %v599 = vor.u32 4788187, %v598
        %v600 = vand.u32 2147483647, %v599
        %v602 = vcvt.s32.f32 %v595
        %v603 = vmul.f32 %v602, %v600
        %v604 = vxor.u32 %v603, 2147483648
        %v605 = vsel %vm522, %v604, %v603
        %v606 = vsub.s32 4, %v582
        %v607 = vsel %vm522, %v606, %v582
        %v608 = vsel %vm521, %v519, %v605
        %v609 = vsel %vm521, 0, %v607
        %v610 = vcosq.f32.pop %v608
        %v611 = vsinq.f32.pop %v608
        %vm612 = vweird.f32 %v519
        %v613 = vand.u32 %v609, 3
        %vm614 = vcmp.lt.s32.totalorder %v613, 2
        %vm615 = vcmp.eq.s32.totalorder %v613, 0
        %v616 = vxor.u32 %v611, 2147483648
        %v617 = vsel %vm615, %v610, %v616
        %vm618 = vcmp.eq.s32.totalorder %v613, 2
        %v619 = vxor.u32 %v610, 2147483648
        %v620 = vsel %vm618, %v619, %v611
        %v621 = vsel %vm614, %v617, %v620
        %v622 = vsel %vm612, nan, %v621
        %v623 = vld [vmem:[%s489] sm:$0xff]
        %v624 = vld [vmem:[%s6] sm:$0xff]
        %v625 = vld [vmem:[%s6 + $0x8] sm:$0xff]
        %v626 = vld [vmem:[%s6 + $0x10] sm:$0xff]
        %v627 = vld [vmem:[%s6 + $0x18] sm:$0xff]
        %v628 = vld [vmem:[%s6 + $0x20] sm:$0xff]
        %v629 = vld [vmem:[%s6 + $0x28] sm:$0xff]
        %v630 = vld [vmem:[%s6 + $0x30] sm:$0xff]
        %v631 = vld [vmem:[%s6 + $0x38] sm:$0xff]
        %v632 = vld [vmem:[%s6 + $0x40] sm:$0xff]
        %v633 = vld [vmem:[%s7] sm:$0xff]
        %v634 = vld [vmem:[%s7 + $0x8] sm:$0xff]
        %vm635 = vcmask 130048
        %v637 = vsel %vm635, %v622, 0
        %639 = vmatprep.subr.mxu0 0.0
        %640 = vmatpush1.msra.mxu0 %v633
        %641 = vmatprep.subr.mxu0 0.0
        %642 = vmatpush1.msra.mxu0 %v634
        %643 = vmatprep.subr.mxu0 0.0
        %644 = vmatpush1.msra.mxu0 0.0
        %645 = vmatprep.subr.mxu0 0.0
        %646 = vmatpush1.msra.mxu0 0.0
        %647 = vmatprep.subr.mxu0 0.0
        %648 = vmatpush1.msra.mxu0 0.0
        %649 = vmatprep.subr.mxu0 0.0
        %650 = vmatpush1.msra.mxu0 0.0
        %651 = vmatprep.subr.mxu0 0.0
        %652 = vmatpush1.msra.mxu0 0.0
        %653 = vmatprep.subr.mxu0 0.0
        %654 = vmatpush1.msra.mxu0 0.0
        %655 = vmatprep.subr.mxu0 0.0
        %656 = vmatpush1.msra.mxu0 0.0
        %657 = vmatprep.subr.mxu0 0.0
        %658 = vmatpush1.msra.mxu0 0.0
        %659 = vmatprep.subr.mxu0 0.0
        %660 = vmatpush1.msra.mxu0 0.0
        %661 = vmatprep.subr.mxu0 0.0
        %662 = vmatpush1.msra.mxu0 0.0
        %663 = vmatprep.subr.mxu0 0.0
        %664 = vmatpush1.msra.mxu0 0.0
        %665 = vmatprep.subr.mxu0 0.0
        %666 = vmatpush1.msra.mxu0 0.0
        %667 = vmatprep.subr.mxu0 0.0
        %668 = vmatpush1.msra.mxu0 0.0
        %669 = vmatprep.subr.mxu0 0.0
        %670 = vmatpush1.msra.mxu0 0.0
        %671 = vmatprep.subr.mxu0 0.0
        %672 = vmatpush1.msra.mxu0 0.0
        %673 = vmatprep.subr.mxu0 0.0
        %674 = vmatpush1.msra.mxu0 0.0
        %675 = vmatprep.subr.mxu0 0.0
        %676 = vmatpush1.msra.mxu0 0.0
        %677 = vmatprep.subr.mxu0 0.0
        %678 = vmatpush1.msra.mxu0 0.0
        %679 = vmatprep.subr.mxu0 0.0
        %680 = vmatpush1.msra.mxu0 0.0
        %681 = vmatprep.subr.mxu0 0.0
        %682 = vmatpush1.msra.mxu0 0.0
        %683 = vmatprep.subr.mxu0 0.0
        %684 = vmatpush1.msra.mxu0 0.0
        %685 = vmatprep.subr.mxu0 0.0
        %686 = vmatpush1.msra.mxu0 0.0
        %687 = vmatprep.subr.mxu0 0.0
        %688 = vmatpush1.msra.mxu0 0.0
        %689 = vmatprep.subr.mxu0 0.0
        %690 = vmatpush1.msra.mxu0 0.0
        %691 = vmatprep.subr.mxu0 0.0
        %692 = vmatpush1.msra.mxu0 0.0
        %693 = vmatprep.subr.mxu0 0.0
        %694 = vmatpush1.msra.mxu0 0.0
        %695 = vmatprep.subr.mxu0 0.0
        %696 = vmatpush1.msra.mxu0 0.0
        %697 = vmatprep.subr.mxu0 0.0
        %698 = vmatpush1.msra.mxu0 0.0
        %699 = vmatprep.subr.mxu0 0.0
        %700 = vmatpush1.msra.mxu0 0.0
        %701 = vmatprep.subr.mxu0 0.0
        %702 = vmatpush1.msra.mxu0 0.0
        %703 = vmatprep.mubr.f32.mxu0 0.0
        %704 = vmatmul.mubr.f32.gmra.mrb[0].mxu0 %v637
        %v705 = vpop.f32.mrb[0].mxu0
        %v706 = vadd.f32 0.0, %v705
        %v707 = vpop.f32.mrb[0].mxu0
        %708 = vdwg.mxu0
        %vm709 = vcmask 588800
        %v711 = vsel %vm709, %v623, 0
        %713 = vmatprep.subr.mxu0 0.0
        %714 = vmatpush1.msra.mxu0 %v624
        %715 = vmatprep.subr.mxu0 0.0
        %716 = vmatpush1.msra.mxu0 %v625
        %717 = vmatprep.subr.mxu0 0.0
        %718 = vmatpush1.msra.mxu0 %v626
        %719 = vmatprep.subr.mxu0 0.0
        %720 = vmatpush1.msra.mxu0 %v627
        %721 = vmatprep.subr.mxu0 0.0
        %722 = vmatpush1.msra.mxu0 %v628
        %723 = vmatprep.subr.mxu0 0.0
        %724 = vmatpush1.msra.mxu0 %v629
        %725 = vmatprep.subr.mxu0 0.0
        %726 = vmatpush1.msra.mxu0 %v630
        %727 = vmatprep.subr.mxu0 0.0
        %728 = vmatpush1.msra.mxu0 %v631
        %729 = vmatprep.subr.mxu0 0.0
        %730 = vmatpush1.msra.mxu0 %v632
        %731 = vmatprep.subr.mxu0 0.0
        %732 = vmatpush1.msra.mxu0 0.0
        %733 = vmatprep.subr.mxu0 0.0
        %734 = vmatpush1.msra.mxu0 0.0
        %735 = vmatprep.subr.mxu0 0.0
        %736 = vmatpush1.msra.mxu0 0.0
        %737 = vmatprep.subr.mxu0 0.0
        %738 = vmatpush1.msra.mxu0 0.0
        %739 = vmatprep.subr.mxu0 0.0
        %740 = vmatpush1.msra.mxu0 0.0
        %741 = vmatprep.subr.mxu0 0.0
        %742 = vmatpush1.msra.mxu0 0.0
        %743 = vmatprep.subr.mxu0 0.0
        %744 = vmatpush1.msra.mxu0 0.0
        %745 = vmatprep.subr.mxu0 0.0
        %746 = vmatpush1.msra.mxu0 0.0
        %747 = vmatprep.subr.mxu0 0.0
        %748 = vmatpush1.msra.mxu0 0.0
        %749 = vmatprep.subr.mxu0 0.0
        %750 = vmatpush1.msra.mxu0 0.0
        %751 = vmatprep.subr.mxu0 0.0
        %752 = vmatpush1.msra.mxu0 0.0
        %753 = vmatprep.subr.mxu0 0.0
        %754 = vmatpush1.msra.mxu0 0.0
        %755 = vmatprep.subr.mxu0 0.0
        %756 = vmatpush1.msra.mxu0 0.0
        %757 = vmatprep.subr.mxu0 0.0
        %758 = vmatpush1.msra.mxu0 0.0
        %759 = vmatprep.subr.mxu0 0.0
        %760 = vmatpush1.msra.mxu0 0.0
        %761 = vmatprep.subr.mxu0 0.0
        %762 = vmatpush1.msra.mxu0 0.0
        %763 = vmatprep.subr.mxu0 0.0
        %764 = vmatpush1.msra.mxu0 0.0
        %765 = vmatprep.subr.mxu0 0.0
        %766 = vmatpush1.msra.mxu0 0.0
        %767 = vmatprep.subr.mxu0 0.0
        %768 = vmatpush1.msra.mxu0 0.0
        %769 = vmatprep.subr.mxu0 0.0
        %770 = vmatpush1.msra.mxu0 0.0
        %771 = vmatprep.subr.mxu0 0.0
        %772 = vmatpush1.msra.mxu0 0.0
        %773 = vmatprep.subr.mxu0 0.0
        %774 = vmatpush1.msra.mxu0 0.0
        %775 = vmatprep.subr.mxu0 0.0
        %776 = vmatpush1.msra.mxu0 0.0
        %777 = vmatprep.mubr.f32.mxu0 0.0
        %778 = vmatmul.mubr.f32.gmra.mrb[0].mxu0 %v711
        %v779 = vpop.f32.mrb[0].mxu0
        %v780 = vadd.f32 %v706, %v779
        %v781 = vpop.f32.mrb[0].mxu0
        %782 = vdwg.mxu0
        %v783 = vld [vmem:[%s493] sm:$0xff]
        %v784 = vld [vmem:[%s8] sm:$0xff]
        %v785 = vld [vmem:[%s8 + $0x8] sm:$0xff]
        %v786 = vld [vmem:[%s8 + $0x10] sm:$0xff]
        %v787 = vld [vmem:[%s8 + $0x18] sm:$0xff]
        %vm788 = vcmask 261120
        %v790 = vsel %vm788, %v783, 0
        %792 = vmatprep.subr.mxu0 0.0
        %793 = vmatpush1.msra.mxu0 %v784
        %794 = vmatprep.subr.mxu0 0.0
        %795 = vmatpush1.msra.mxu0 %v785
        %796 = vmatprep.subr.mxu0 0.0
        %797 = vmatpush1.msra.mxu0 %v786
        %798 = vmatprep.subr.mxu0 0.0
        %799 = vmatpush1.msra.mxu0 %v787
        %800 = vmatprep.subr.mxu0 0.0
        %801 = vmatpush1.msra.mxu0 0.0
        %802 = vmatprep.subr.mxu0 0.0
        %803 = vmatpush1.msra.mxu0 0.0
        %804 = vmatprep.subr.mxu0 0.0
        %805 = vmatpush1.msra.mxu0 0.0
        %806 = vmatprep.subr.mxu0 0.0
        %807 = vmatpush1.msra.mxu0 0.0
        %808 = vmatprep.subr.mxu0 0.0
        %809 = vmatpush1.msra.mxu0 0.0
        %810 = vmatprep.subr.mxu0 0.0
        %811 = vmatpush1.msra.mxu0 0.0
        %812 = vmatprep.subr.mxu0 0.0
        %813 = vmatpush1.msra.mxu0 0.0
        %814 = vmatprep.subr.mxu0 0.0
        %815 = vmatpush1.msra.mxu0 0.0
        %816 = vmatprep.subr.mxu0 0.0
        %817 = vmatpush1.msra.mxu0 0.0
        %818 = vmatprep.subr.mxu0 0.0
        %819 = vmatpush1.msra.mxu0 0.0
        %820 = vmatprep.subr.mxu0 0.0
        %821 = vmatpush1.msra.mxu0 0.0
        %822 = vmatprep.subr.mxu0 0.0
        %823 = vmatpush1.msra.mxu0 0.0
        %824 = vmatprep.subr.mxu0 0.0
        %825 = vmatpush1.msra.mxu0 0.0
        %826 = vmatprep.subr.mxu0 0.0
        %827 = vmatpush1.msra.mxu0 0.0
        %828 = vmatprep.subr.mxu0 0.0
        %829 = vmatpush1.msra.mxu0 0.0
        %830 = vmatprep.subr.mxu0 0.0
        %831 = vmatpush1.msra.mxu0 0.0
        %832 = vmatprep.subr.mxu0 0.0
        %833 = vmatpush1.msra.mxu0 0.0
        %834 = vmatprep.subr.mxu0 0.0
        %835 = vmatpush1.msra.mxu0 0.0
        %836 = vmatprep.subr.mxu0 0.0
        %837 = vmatpush1.msra.mxu0 0.0
        %838 = vmatprep.subr.mxu0 0.0
        %839 = vmatpush1.msra.mxu0 0.0
        %840 = vmatprep.subr.mxu0 0.0
        %841 = vmatpush1.msra.mxu0 0.0
        %842 = vmatprep.subr.mxu0 0.0
        %843 = vmatpush1.msra.mxu0 0.0
        %844 = vmatprep.subr.mxu0 0.0
        %845 = vmatpush1.msra.mxu0 0.0
        %846 = vmatprep.subr.mxu0 0.0
        %847 = vmatpush1.msra.mxu0 0.0
        %848 = vmatprep.subr.mxu0 0.0
        %849 = vmatpush1.msra.mxu0 0.0
        %850 = vmatprep.subr.mxu0 0.0
        %851 = vmatpush1.msra.mxu0 0.0
        %852 = vmatprep.subr.mxu0 0.0
        %853 = vmatpush1.msra.mxu0 0.0
        %854 = vmatprep.subr.mxu0 0.0
        %855 = vmatpush1.msra.mxu0 0.0
        %856 = vmatprep.mubr.f32.mxu0 0.0
        %857 = vmatmul.mubr.f32.gmra.mrb[0].mxu0 %v790
        %v858 = vpop.f32.mrb[0].mxu0
        %v859 = vadd.f32 0.0, %v858
        %v860 = vpop.f32.mrb[0].mxu0
        %861 = vdwg.mxu0
        %v862 = vadd.f32 %v780, %v859
        %v863 = vld [vmem:[%s9] sm:$0x1]
        %v865 = vlaneseq
        %v866 = vshrl.u32 %v865, 7
        %v867 = vsub.s32 0, %v866
        %v868 = vrot.slane %v863, %v867
        %v870 = vadd.f32 %v862, %v868
        %v871 = vtanh.pop %v870
        %872 = vst.msk [vmem:[%s474] sm:$0xff] %vm788, %v871
        %v873 = vld [vmem:[%s497] sm:$0xff]
        %v874 = vld [vmem:[%s10] sm:$0xff]
        %v875 = vld [vmem:[%s10 + $0x8] sm:$0xf]
        %vm876 = vcmask 97280
        %v878 = vsel %vm876, %v873, 0
        %vm880 = vcmask 1043456
        %v882 = vsel %vm880, %v875, 0
        %884 = vmatprep.subr.mxu0 0.0
        %885 = vmatpush1.msra.mxu0 %v874
        %886 = vmatprep.subr.mxu0 0.0
        %887 = vmatpush1.msra.mxu0 %v882
        %888 = vmatprep.subr.mxu0 0.0
        %889 = vmatpush1.msra.mxu0 0.0
        %890 = vmatprep.subr.mxu0 0.0
        %891 = vmatpush1.msra.mxu0 0.0
        %892 = vmatprep.subr.mxu0 0.0
        %893 = vmatpush1.msra.mxu0 0.0
        %894 = vmatprep.subr.mxu0 0.0
        %895 = vmatpush1.msra.mxu0 0.0
        %896 = vmatprep.subr.mxu0 0.0
        %897 = vmatpush1.msra.mxu0 0.0
        %898 = vmatprep.subr.mxu0 0.0
        %899 = vmatpush1.msra.mxu0 0.0
        %900 = vmatprep.subr.mxu0 0.0
        %901 = vmatpush1.msra.mxu0 0.0
        %902 = vmatprep.subr.mxu0 0.0
        %903 = vmatpush1.msra.mxu0 0.0
        %904 = vmatprep.subr.mxu0 0.0
        %905 = vmatpush1.msra.mxu0 0.0
        %906 = vmatprep.subr.mxu0 0.0
        %907 = vmatpush1.msra.mxu0 0.0
        %908 = vmatprep.subr.mxu0 0.0
        %909 = vmatpush1.msra.mxu0 0.0
        %910 = vmatprep.subr.mxu0 0.0
        %911 = vmatpush1.msra.mxu0 0.0
        %912 = vmatprep.subr.mxu0 0.0
        %913 = vmatpush1.msra.mxu0 0.0
        %914 = vmatprep.subr.mxu0 0.0
        %915 = vmatpush1.msra.mxu0 0.0
        %916 = vmatprep.subr.mxu0 0.0
        %917 = vmatpush1.msra.mxu0 0.0
        %918 = vmatprep.subr.mxu0 0.0
        %919 = vmatpush1.msra.mxu0 0.0
        %920 = vmatprep.subr.mxu0 0.0
        %921 = vmatpush1.msra.mxu0 0.0
        %922 = vmatprep.subr.mxu0 0.0
        %923 = vmatpush1.msra.mxu0 0.0
        %924 = vmatprep.subr.mxu0 0.0
        %925 = vmatpush1.msra.mxu0 0.0
        %926 = vmatprep.subr.mxu0 0.0
        %927 = vmatpush1.msra.mxu0 0.0
        %928 = vmatprep.subr.mxu0 0.0
        %929 = vmatpush1.msra.mxu0 0.0
        %930 = vmatprep.subr.mxu0 0.0
        %931 = vmatpush1.msra.mxu0 0.0
        %932 = vmatprep.subr.mxu0 0.0
        %933 = vmatpush1.msra.mxu0 0.0
        %934 = vmatprep.subr.mxu0 0.0
        %935 = vmatpush1.msra.mxu0 0.0
        %936 = vmatprep.subr.mxu0 0.0
        %937 = vmatpush1.msra.mxu0 0.0
        %938 = vmatprep.subr.mxu0 0.0
        %939 = vmatpush1.msra.mxu0 0.0
        %940 = vmatprep.subr.mxu0 0.0
        %941 = vmatpush1.msra.mxu0 0.0
        %942 = vmatprep.subr.mxu0 0.0
        %943 = vmatpush1.msra.mxu0 0.0
        %944 = vmatprep.subr.mxu0 0.0
        %945 = vmatpush1.msra.mxu0 0.0
        %946 = vmatprep.subr.mxu0 0.0
        %947 = vmatpush1.msra.mxu0 0.0
        %948 = vmatprep.mubr.f32.mxu0 0.0
        %949 = vmatmul.mubr.f32.gmra.mrb[0].mxu0 %v878
        %v950 = vpop.f32.mrb[0].mxu0
        %v951 = vadd.f32 0.0, %v950
        %v952 = vpop.f32.mrb[0].mxu0
        %953 = vdwg.mxu0
        %v954 = vadd.f32 %v871, %v951
        %v955 = vld [vmem:[%s11] sm:$0x1]
        %v957 = vlaneseq
        %v958 = vshrl.u32 %v957, 7
        %v959 = vsub.s32 0, %v958
        %v960 = vrot.slane %v955, %v959
        %v962 = vadd.f32 %v954, %v960
        %963 = vst.msk [vmem:[%s481] sm:$0xff] %vm788, %v962
        %s964 = sand.u32 %s311, 1
        %s965 = scalar_lea.sflag [#allocation3], %s964
        %s966 = sand.u32 %s311, 1
        %s967 = smul.addr %s966, 8
        %s968 = scalar_lea.vmem [#allocation2], %s967
        %s969 = sand.u32 %s337, 1
        %s970 = scalar_lea.sflag [#allocation5], %s969
        %s971 = sand.u32 %s337, 1
        %s972 = smul.addr %s971, 8
        %s973 = scalar_lea.vmem [#allocation4], %s972
        // Predicated region
        $region69: #{tpu_custom_call.1} parent=67 // pred_check
          %p974 = pneg %p321
        $region70: #{tpu_custom_call.1} parent=67 // pred_check_branch
          %976 = sbr.rel (%p974) target = $region72
        $region71: #{tpu_custom_call.1} parent=67 // pred_region
          %s978 = ssub.s32 128, 128
          %979 = vsyncadd %s965, %s978
          %s980 = smul.addr %s31, 128
          %s981 = scalar_lea.hbm %s12, %s980
          %s983 = sshll.u32 %s968, 4
          %s984 = int_to_ptr.vmem [resolvable:$true] %s983
          %986 = dma.vmem_to_hbm [thread:$0]  %s984, 128, %s981, %s965
        $region72: #{tpu_custom_call.1} parent=67 // pred_fallthru
          _
        // Predicated region
        $region73: #{tpu_custom_call.1} parent=67 // pred_check
          %p987 = pneg %p347
        $region74: #{tpu_custom_call.1} parent=67 // pred_check_branch
          %989 = sbr.rel (%p987) target = $region76
        $region75: #{tpu_custom_call.1} parent=67 // pred_region
          %s991 = ssub.s32 128, 128
          %992 = vsyncadd %s970, %s991
          %s993 = smul.addr %s31, 128
          %s994 = scalar_lea.hbm %s13, %s993
          %s996 = sshll.u32 %s973, 4
          %s997 = int_to_ptr.vmem [resolvable:$true] %s996
          %999 = dma.vmem_to_hbm [thread:$0]  %s997, 128, %s994, %s970
        $region76: #{tpu_custom_call.1} parent=67 // pred_fallthru
          _
      $region68: #{tpu_custom_call.1} parent=5 // pred_fallthru
        _
      %p1000 = scmp.le.s32.totalorder 2, %s26
      // Predicated region
      $region77: #{tpu_custom_call.1} parent=5 // pred_check
        %p1001 = pneg %p1000
      $region78: #{tpu_custom_call.1} parent=5 // pred_check_branch
        %1003 = sbr.rel (%p1001) target = $region80
      $region79: #{tpu_custom_call.1} parent=5 // pred_region
        %s1004 = ssub.s32 %s26, 2
        // Predicated region
        $region81: #{tpu_custom_call.1} parent=79 // pred_check
          %p1005 = pneg %p327
        $region82: #{tpu_custom_call.1} parent=79 // pred_check_branch
          %1007 = sbr.rel (%p1005) target = $region84
        $region83: #{tpu_custom_call.1} parent=79 // pred_region
          %s1008 = sand.u32 %s312, 1
          %s1009 = scalar_lea.sflag [#allocation3], %s1008
          %s1010 = sand.u32 %s312, 1
          %s1011 = smul.addr %s1010, 8
          %s1012 = scalar_lea.vmem [#allocation2], %s1011
          %1013 = dma.done %s1009, 128
        $region84: #{tpu_custom_call.1} parent=79 // pred_fallthru
          _
        // Predicated region
        $region85: #{tpu_custom_call.1} parent=79 // pred_check
          %p1014 = pneg %p353
        $region86: #{tpu_custom_call.1} parent=79 // pred_check_branch
          %1016 = sbr.rel (%p1014) target = $region88
        $region87: #{tpu_custom_call.1} parent=79 // pred_region
          %s1017 = sand.u32 %s338, 1
          %s1018 = scalar_lea.sflag [#allocation5], %s1017
          %s1019 = sand.u32 %s338, 1
          %s1020 = smul.addr %s1019, 8
          %s1021 = scalar_lea.vmem [#allocation4], %s1020
          %1022 = dma.done %s1018, 128
        $region88: #{tpu_custom_call.1} parent=79 // pred_fallthru
          _
      $region80: #{tpu_custom_call.1} parent=5 // pred_fallthru
        _
    $region6: #{tpu_custom_call.1} parent=1 // loop_footer
      %s30 = sadd.s32 1, %s26
    $region7: #{tpu_custom_call.1} parent=1 // loop_footer_branch
      %25 = sbr.rel target = $region3
    $region8: #{tpu_custom_call.1} parent=1 // loop_exit
      _
    %1023 = vsyncpa [#allocation3], 1
    %s1024 = scalar_lea.sflag [#allocation3], 1
    %1025 = vsyncpa %s1024, 1
    %1026 = vsyncpa [#allocation5], 1
    %s1027 = scalar_lea.sflag [#allocation5], 1
    %1028 = vsyncpa %s1027, 1

</llo_original>
